<compile_context>
chip_gen: v7x
topology: tpu7x:2x2x1
jax: 0.10.0
libtpu: 0.0.40
codegen_flags: <defaults>
</compile_context>

<pallas_src>
import math

import jax
import jax.numpy as jnp
from jax.experimental import pallas as pl
from jax.experimental.pallas import tpu as pltpu


def _round_up(v, m):
    return ((v + m - 1) // m) * m


def _pick_tile(n_pad, cap):
    """Largest multiple of 128 <= cap that divides n_pad (n_pad % 128 == 0)."""
    if n_pad <= cap:
        return n_pad
    t = (cap // 128) * 128
    while t > 128 and n_pad % t != 0:
        t -= 128
    return max(t, 128)


def _vmem_budget_bytes():
    """~75% of this generation's physical VMEM (v5e/v6e ~96 MiB, v7x ~48 MiB)."""
    try:
        cap = int(pltpu.get_tpu_info().vmem_capacity_bytes)
    except Exception:
        cap = 64 * 1024 * 1024
    return cap * 3 // 4


def _gcn_kernel(adj_ref, s_ref, o_ref, acc_ref):
    # adj_ref: (TM, TK)    row / contraction tile of the adjacency
    # s_ref  : (TK, F_pad) contraction tile of the fused support x @ W
    # o_ref  : (TM, F_pad) output tile in caller dtype (lane-dense, F_pad%128==0)
    # acc_ref: (TM, F_pad) f32 accumulator scratch
    k = pl.program_id(1)

    @pl.when(k == 0)
    def _():
        acc_ref[...] = jnp.zeros_like(acc_ref)

    acc_ref[...] += jnp.dot(adj_ref[...], s_ref[...],
                            preferred_element_type=jnp.float32)

    @pl.when(k == pl.num_programs(1) - 1)
    def _():
        o_ref[...] = jnp.maximum(acc_ref[...], 0.0).astype(o_ref.dtype)


def graph_convolution_forward(x, adj, weight, *, compute_dtype=jnp.bfloat16,
                              row_tile=512, k_tile=2048):
    """relu(adj @ (x[k] @ W)) for every MIMO copy k, in one fused Pallas call.

    compute_dtype: dtype of the MXU inputs (adj, x @ W).  Defaults to bf16
      (f32 accumulation in-kernel) since the kernel is adj-HBM-bound; pass
      jnp.float32 for exact parity, or None to keep the input dtypes.
    """
    K, N, F_in = x.shape
    F_out = weight.shape[1]
    KF_out = K * F_out

    out_dtype = x.dtype
    if compute_dtype is None:
        compute_dt = jnp.promote_types(x.dtype, adj.dtype)
    else:
        compute_dt = jnp.dtype(compute_dtype)

    N_pad = _round_up(N, 128)
    F_pad = _round_up(KF_out, 128)          # lane-dense output stores

    # ---- wrapper-side prep (cheap next to the N^2 contraction) --------------
    # Per-copy projection; FLOPs are K*N*F_in*F_out << N^2 * K*F_out.
    support = jnp.einsum("knf,fo->kno", x, weight, precision="highest")
    # Fuse MIMO copies along lanes: (K, N, F_out) -> (N, K*F_out), col = k*F_out + f
    s_f = jnp.transpose(support, (1, 0, 2)).reshape(N, KF_out)
    s_f = jnp.pad(s_f, ((0, N_pad - N), (0, F_pad - KF_out))).astype(compute_dt)

    adj_p = adj.astype(compute_dt)
    if N_pad != N:
        # At most 127 extra rows/cols; no padded copy at all when 128-aligned.
        adj_p = jnp.pad(adj_p, ((0, N_pad - N), (0, N_pad - N)))

    # ---- generation-aware tiling / VMEM budget -------------------------------
    in_b = jnp.dtype(compute_dt).itemsize
    out_b = jnp.dtype(out_dtype).itemsize
    budget = _vmem_budget_bytes()
    TM = _pick_tile(N_pad, row_tile)
    TK = _pick_tile(N_pad, k_tile)

    def _need(tm, tk):
        return (2 * tm * tk * in_b           # adj tile, double-buffered
                + 2 * tk * F_pad * in_b      # support tile, double-buffered
                + 2 * tm * F_pad * out_b     # output tile, double-buffered
                + tm * F_pad * 4)            # f32 accumulator scratch

    while _need(TM, TK) > budget and (TM > 128 or TK > 128):
        if TK >= TM and TK > 128:
            TK = _pick_tile(N_pad, TK - 128)
        else:
            TM = _pick_tile(N_pad, TM - 128)

    n_i = N_pad // TM
    n_k = N_pad // TK
    need = _need(TM, TK)
    vmem_limit = int(max(min(max(need * 5 // 4, 16 * 1024 * 1024), budget), need))

    # Advisory cost estimate for XLA scheduling around the custom call.
    flops = 2 * N_pad * N_pad * F_pad
    bytes_accessed = (N_pad * N_pad * in_b           # adj, streamed once
                      + n_i * N_pad * F_pad * in_b   # support, re-read per row tile
                      + N_pad * F_pad * out_b)       # output

    out_f = pl.pallas_call(
        _gcn_kernel,
        out_shape=jax.ShapeDtypeStruct((N_pad, F_pad), out_dtype),
        grid_spec=pltpu.PrefetchScalarGridSpec(
            num_scalar_prefetch=0,
            grid=(n_i, n_k),
            in_specs=[
                pl.BlockSpec((TM, TK), lambda i, k: (i, k)),      # adj tile
                pl.BlockSpec((TK, F_pad), lambda i, k: (k, 0)),   # fused support
            ],
            out_specs=pl.BlockSpec((TM, F_pad), lambda i, k: (i, 0)),
            scratch_shapes=[pltpu.VMEM((TM, F_pad), jnp.float32)],
        ),
        compiler_params=pltpu.CompilerParams(
            dimension_semantics=("parallel", "arbitrary"),
            vmem_limit_bytes=vmem_limit,
        ),
        cost_estimate=pl.CostEstimate(
            flops=int(flops), transcendentals=0,
            bytes_accessed=int(bytes_accessed)),
    )(adj_p, s_f)

    # Unfuse lanes: (N_pad, F_pad) -> (K, N, F_out); already in caller dtype.
    out = out_f[:N, :KF_out].reshape(N, K, F_out)
    return jnp.transpose(out, (1, 0, 2))


def init_params(key, in_features, out_features):
    """Deterministic parameter init matching the module's __init__ shapes."""
    k_w, k_a = jax.random.split(key)
    # xavier_uniform_ for weight (in_features, out_features)
    bound = math.sqrt(6.0 / (in_features + out_features))
    weight = jax.random.uniform(
        k_w, (in_features, out_features), jnp.float32, -bound, bound
    )
    # `a` is declared in __init__ but unused in forward; keep for parity.
    a = jax.random.normal(k_a, (2 * out_features, 1), jnp.float32)
    # TODO(synk): training-mode dropout (p=0.0 default is identity) would need
    # pltpu.prng_seed/prng_random_bits in-kernel; not implemented.
    return weight, a


if __name__ == "__main__":
    key = jax.random.PRNGKey(0)
    k_x, k_adj, k_p = jax.random.split(key, 3)

    K, N = 2, 16
    in_features, out_features = 8, 32

    x = jax.random.normal(k_x, (K, N, in_features), jnp.float32)

    # symmetric row-normalized adjacency (dense stand-in for spmm's sparse adj)
    adj_raw = (jax.random.uniform(k_adj, (N, N)) > 0.7).astype(jnp.float32)
    adj_raw = adj_raw + adj_raw.T + jnp.eye(N, dtype=jnp.float32)
    adj = adj_raw / jnp.sum(adj_raw, axis=1, keepdims=True)

    weight, a_param = init_params(k_p, in_features, out_features)

    # f32 reference (same association as the PyTorch module).
    ref_support = jnp.einsum("knf,fo->kno", x, weight, precision="highest")
    ref = jnp.maximum(
        jnp.einsum("ij,kjf->kif", adj, ref_support, precision="highest"), 0.0)

    # f32 opt-out path: exact parity with the reference.
    out_f32 = graph_convolution_forward(x, adj, weight,
                                        compute_dtype=jnp.float32)
    out_f32 = jax.block_until_ready(out_f32)
    assert out_f32.shape == (K, N, out_features)
    assert jnp.allclose(out_f32, ref, atol=1e-5, rtol=1e-5)

    # Default path: bf16 MXU inputs, f32 accumulation in-kernel.
    out_bf16 = graph_convolution_forward(x, adj, weight)
    out_bf16 = jax.block_until_ready(out_bf16)
    assert out_bf16.shape == (K, N, out_features)
    assert jnp.allclose(out_bf16, ref, atol=1e-1, rtol=1e-1)

    print("KERNEL_OK")
</pallas_src>

<mosaic_0001>
module attributes {stable_mosaic.version = 11 : i64} {
  func.func @_gcn_kernel(%arg0: i32, %arg1: i32, %arg2: memref<128x128xf32, #tpu.memory_space<vmem>>, %arg3: memref<128x128xf32, #tpu.memory_space<vmem>>, %arg4: memref<128x128xf32, #tpu.memory_space<vmem>>, %arg5: memref<128x128xf32, #tpu.memory_space<vmem>>) attributes {dimension_semantics = [#tpu.dimension_semantics<parallel>, #tpu.dimension_semantics<arbitrary>], iteration_bounds = array<i64: 1, 1>, scalar_prefetch = 0 : i64, scratch_operands = 1 : i64, tpu.core_type = #tpu.core_type<tc>, window_params = [{transform_indices = @transform_0, window_bounds = array<i64: 128, 128>}, {transform_indices = @transform_1, window_bounds = array<i64: 128, 128>}, {transform_indices = @transform_2, window_bounds = array<i64: 128, 128>}]} {
    %c0_i32 = arith.constant 0 : i32
    %0 = arith.cmpi eq, %arg1, %c0_i32 : i32
    %1 = arith.extui %0 : i1 to i32
    %c0_i32_0 = arith.constant 0 : i32
    %2 = arith.cmpi ne, %1, %c0_i32_0 : i32
    scf.if %2 {
      %cst_10 = arith.constant 0.000000e+00 : f32
      %12 = vector.broadcast %cst_10 : f32 to vector<128x128xf32>
      %c0_11 = arith.constant 0 : index
      %c0_12 = arith.constant 0 : index
      %13 = vector.load %arg5[%c0_11, %c0_12] : memref<128x128xf32, #tpu.memory_space<vmem>>, vector<128x128xf32>
      tpu.vector_store %arg5[%c0_11, %c0_12], %12 {strides = array<i32>} : memref<128x128xf32, #tpu.memory_space<vmem>>, vector<128x128xf32>,
    } else {
    }
    %c0 = arith.constant 0 : index
    %c0_1 = arith.constant 0 : index
    %3 = vector.load %arg5[%c0, %c0_1] : memref<128x128xf32, #tpu.memory_space<vmem>>, vector<128x128xf32>
    %c0_2 = arith.constant 0 : index
    %c0_3 = arith.constant 0 : index
    %4 = vector.load %arg2[%c0_2, %c0_3] : memref<128x128xf32, #tpu.memory_space<vmem>>, vector<128x128xf32>
    %c0_4 = arith.constant 0 : index
    %c0_5 = arith.constant 0 : index
    %5 = vector.load %arg3[%c0_4, %c0_5] : memref<128x128xf32, #tpu.memory_space<vmem>>, vector<128x128xf32>
    %cst = arith.constant dense<0.000000e+00> : vector<128x128xf32>
    %6 = tpu.matmul %4, %5, %cst {dimension_numbers = #tpu.dot_dimension_numbers<[1], [0], [0], [1], [0, 0, 1, 1], [], []>} : vector<128x128xf32>, vector<128x128xf32>, vector<128x128xf32> -> vector<128x128xf32>
    %7 = arith.addf %3, %6 : vector<128x128xf32>
    %c0_6 = arith.constant 0 : index
    %c0_7 = arith.constant 0 : index
    %8 = vector.load %arg5[%c0_6, %c0_7] : memref<128x128xf32, #tpu.memory_space<vmem>>, vector<128x128xf32>
    tpu.vector_store %arg5[%c0_6, %c0_7], %7 {strides = array<i32>} : memref<128x128xf32, #tpu.memory_space<vmem>>, vector<128x128xf32>,
    %c0_i32_8 = arith.constant 0 : i32
    %9 = arith.cmpi eq, %arg1, %c0_i32_8 : i32
    %10 = arith.extui %9 : i1 to i32
    %c0_i32_9 = arith.constant 0 : i32
    %11 = arith.cmpi ne, %10, %c0_i32_9 : i32
    scf.if %11 {
      %c0_10 = arith.constant 0 : index
      %c0_11 = arith.constant 0 : index
      %12 = vector.load %arg5[%c0_10, %c0_11] : memref<128x128xf32, #tpu.memory_space<vmem>>, vector<128x128xf32>
      %cst_12 = arith.constant 0.000000e+00 : f32
      %13 = vector.broadcast %cst_12 : f32 to vector<128x128xf32>
      %14 = arith.maximumf %12, %13 : vector<128x128xf32>
      %c0_13 = arith.constant 0 : index
      %c0_14 = arith.constant 0 : index
      %15 = vector.load %arg4[%c0_13, %c0_14] : memref<128x128xf32, #tpu.memory_space<vmem>>, vector<128x128xf32>
      tpu.vector_store %arg4[%c0_13, %c0_14], %14 {strides = array<i32>} : memref<128x128xf32, #tpu.memory_space<vmem>>, vector<128x128xf32>,
    } else {
    }
    return
  }
  func.func @transform_0(%arg0: i32, %arg1: i32) -> (i32, i32) {
    %c0_i32 = arith.constant 0 : i32
    return %arg0, %arg1 : i32, i32
  }
  func.func @transform_1(%arg0: i32, %arg1: i32) -> (i32, i32) {
    %c0_i32 = arith.constant 0 : i32
    %c0_i32_0 = arith.constant 0 : i32
    return %arg1, %c0_i32 : i32, i32
  }
  func.func @transform_2(%arg0: i32, %arg1: i32) -> (i32, i32) {
    %c0_i32 = arith.constant 0 : i32
    %c0_i32_0 = arith.constant 0 : i32
    return %arg0, %c0_i32 : i32, i32
  }
}

</mosaic_0001>

<llo_original>
// kernel: tpu_custom_call.1
$region0: #{tpu_custom_call.1}
  #allocation0 [shape = 'u32[]', space=smem, size = 0x4, offset = 0x4, fixed_abs, tag = 'smem constant byte address 0x4 - core index']
  #allocation1 [shape = 'u32[144,128]{1,0:T(1,128)}', space=vmem, size = 0x12000, scoped, tag = 'internal scratch']
  #allocation2 [shape = 'f32[128,128]{1,0:T(8,128)}', space=vmem, size = 0x10000, scoped, tag = 'scratch operand']
  %s0 = inlined_call_operand.hbm [shape: f32[128,128], index: 0, kind: input, shape index: {}]
  %s1 = inlined_call_operand.hbm [shape: f32[128,128], index: 1, kind: input, shape index: {}]
  %s2 = inlined_call_operand.hbm [shape: f32[128,128], index: 2, kind: output, shape index: {}]
  %s3 = sld [smem:[#allocation0]]
  $region34: #{tpu_custom_call.1} parent=0
    _
  %s5 = ssub.s32 1, %s3
  %s6 = scalar_select 0, %s5, %s3
  $region1: #{tpu_custom_call.1} parent=0
    #allocation3 [shape = 'u8[65536]{0}', space=vmem, size = 0x10000, scoped, tag = 'input window, operand 0, single buffered']
    #allocation4 [shape = 's32[1]{0}', space=sflag, size = 0x4, scoped, tag = 'scoped memory for tpu_custom_call.1']
    #allocation5 [shape = 's32[1]{0}', space=sflag, size = 0x4, scoped, tag = 'scoped memory for tpu_custom_call.1']
    #allocation6 [shape = 'u8[65536]{0}', space=vmem, size = 0x10000, scoped, tag = 'input window, operand 1, single buffered']
    #allocation7 [shape = 's32[1]{0}', space=sflag, size = 0x4, scoped, tag = 'scoped memory for tpu_custom_call.1']
    #allocation8 [shape = 'u8[65536]{0}', space=vmem, size = 0x10000, scoped, tag = 'output window, operand 0, single buffered']
    %7 = vsyncpa [#allocation4], 0
    %8 = vsyncpa [#allocation7], 0
    %9 = vsyncpa [#allocation5], 0
    // Predicated region
    $region2: #{tpu_custom_call.1} parent=1 // pred_check
      _
    $region3: #{tpu_custom_call.1} parent=1 // pred_check_branch
      %11 = sbr.rel (0) target = $region5
    $region4: #{tpu_custom_call.1} parent=1 // pred_region
      %s13 = ssub.s32 2048, 2048
      %14 = vsyncadd [#allocation4], %s13
      %s15 = sshll.u32 [#allocation3], 4
      %s16 = int_to_ptr.vmem [resolvable:$true] %s15
      %21 = dma.hbm_to_vmem [thread:$0]  %s0, 2048, %s16, [#allocation4], 128, 128, 8
    $region5: #{tpu_custom_call.1} parent=1 // pred_fallthru
      _
    // Predicated region
    $region6: #{tpu_custom_call.1} parent=1 // pred_check
      _
    $region7: #{tpu_custom_call.1} parent=1 // pred_check_branch
      %23 = sbr.rel (0) target = $region9
    $region8: #{tpu_custom_call.1} parent=1 // pred_region
      %s25 = ssub.s32 2048, 2048
      %26 = vsyncadd [#allocation7], %s25
      %s27 = sshll.u32 [#allocation6], 4
      %s28 = int_to_ptr.vmem [resolvable:$true] %s27
      %33 = dma.hbm_to_vmem [thread:$0]  %s1, 2048, %s28, [#allocation7], 128, 128, 8
    $region9: #{tpu_custom_call.1} parent=1 // pred_fallthru
      _
    // Predicated region
    $region10: #{tpu_custom_call.1} parent=1 // pred_check
      _
    $region11: #{tpu_custom_call.1} parent=1 // pred_check_branch
      %35 = sbr.rel (0) target = $region13
    $region12: #{tpu_custom_call.1} parent=1 // pred_region
      %36 = dma.done [#allocation4], 2048
    $region13: #{tpu_custom_call.1} parent=1 // pred_fallthru
      _
    // Predicated region
    $region14: #{tpu_custom_call.1} parent=1 // pred_check
      _
    $region15: #{tpu_custom_call.1} parent=1 // pred_check_branch
      %38 = sbr.rel (0) target = $region17
    $region16: #{tpu_custom_call.1} parent=1 // pred_region
      %39 = dma.done [#allocation7], 2048
    $region17: #{tpu_custom_call.1} parent=1 // pred_fallthru
      _
    %p40 = scmp.eq.s32.totalorder 0, 0
    // Predicated region
    $region18: #{tpu_custom_call.1} parent=1 // pred_check
      %p41 = pneg %p40
    $region19: #{tpu_custom_call.1} parent=1 // pred_check_branch
      %43 = sbr.rel (%p41) target = $region21
    $region20: #{tpu_custom_call.1} parent=1 // pred_region
      %44 = vst [vmem:[#allocation2] sm:$0xff] 0.0
      %45 = vst [vmem:[#allocation2 + $0x8] sm:$0xff] 0.0
      %46 = vst [vmem:[#allocation2 + $0x10] sm:$0xff] 0.0
      %47 = vst [vmem:[#allocation2 + $0x18] sm:$0xff] 0.0
      %48 = vst [vmem:[#allocation2 + $0x20] sm:$0xff] 0.0
      %49 = vst [vmem:[#allocation2 + $0x28] sm:$0xff] 0.0
      %50 = vst [vmem:[#allocation2 + $0x30] sm:$0xff] 0.0
      %51 = vst [vmem:[#allocation2 + $0x38] sm:$0xff] 0.0
      %52 = vst [vmem:[#allocation2 + $0x40] sm:$0xff] 0.0
      %53 = vst [vmem:[#allocation2 + $0x48] sm:$0xff] 0.0
      %54 = vst [vmem:[#allocation2 + $0x50] sm:$0xff] 0.0
      %55 = vst [vmem:[#allocation2 + $0x58] sm:$0xff] 0.0
      %56 = vst [vmem:[#allocation2 + $0x60] sm:$0xff] 0.0
      %57 = vst [vmem:[#allocation2 + $0x68] sm:$0xff] 0.0
      %58 = vst [vmem:[#allocation2 + $0x70] sm:$0xff] 0.0
      %59 = vst [vmem:[#allocation2 + $0x78] sm:$0xff] 0.0
    $region21: #{tpu_custom_call.1} parent=1 // pred_fallthru
      _
    %v60 = vld [vmem:[#allocation2] sm:$0xff]
    %v61 = vld [vmem:[#allocation2 + $0x8] sm:$0xff]
    %v62 = vld [vmem:[#allocation2 + $0x10] sm:$0xff]
    %v63 = vld [vmem:[#allocation2 + $0x18] sm:$0xff]
    %v64 = vld [vmem:[#allocation2 + $0x20] sm:$0xff]
    %v65 = vld [vmem:[#allocation2 + $0x28] sm:$0xff]
    %v66 = vld [vmem:[#allocation2 + $0x30] sm:$0xff]
    %v67 = vld [vmem:[#allocation2 + $0x38] sm:$0xff]
    %v68 = vld [vmem:[#allocation2 + $0x40] sm:$0xff]
    %v69 = vld [vmem:[#allocation2 + $0x48] sm:$0xff]
    %v70 = vld [vmem:[#allocation2 + $0x50] sm:$0xff]
    %v71 = vld [vmem:[#allocation2 + $0x58] sm:$0xff]
    %v72 = vld [vmem:[#allocation2 + $0x60] sm:$0xff]
    %v73 = vld [vmem:[#allocation2 + $0x68] sm:$0xff]
    %v74 = vld [vmem:[#allocation2 + $0x70] sm:$0xff]
    %v75 = vld [vmem:[#allocation2 + $0x78] sm:$0xff]
    %v76 = vld [vmem:[#allocation3] sm:$0xff]
    %v77 = vld [vmem:[#allocation3 + $0x8] sm:$0xff]
    %v78 = vld [vmem:[#allocation3 + $0x10] sm:$0xff]
    %v79 = vld [vmem:[#allocation3 + $0x18] sm:$0xff]
    %v80 = vld [vmem:[#allocation3 + $0x20] sm:$0xff]
    %v81 = vld [vmem:[#allocation3 + $0x28] sm:$0xff]
    %v82 = vld [vmem:[#allocation3 + $0x30] sm:$0xff]
    %v83 = vld [vmem:[#allocation3 + $0x38] sm:$0xff]
    %v84 = vld [vmem:[#allocation3 + $0x40] sm:$0xff]
    %v85 = vld [vmem:[#allocation3 + $0x48] sm:$0xff]
    %v86 = vld [vmem:[#allocation3 + $0x50] sm:$0xff]
    %v87 = vld [vmem:[#allocation3 + $0x58] sm:$0xff]
    %v88 = vld [vmem:[#allocation3 + $0x60] sm:$0xff]
    %v89 = vld [vmem:[#allocation3 + $0x68] sm:$0xff]
    %v90 = vld [vmem:[#allocation3 + $0x70] sm:$0xff]
    %v91 = vld [vmem:[#allocation3 + $0x78] sm:$0xff]
    %v92 = vld [vmem:[#allocation6] sm:$0xff]
    %v93 = vld [vmem:[#allocation6 + $0x8] sm:$0xff]
    %v94 = vld [vmem:[#allocation6 + $0x10] sm:$0xff]
    %v95 = vld [vmem:[#allocation6 + $0x18] sm:$0xff]
    %v96 = vld [vmem:[#allocation6 + $0x20] sm:$0xff]
    %v97 = vld [vmem:[#allocation6 + $0x28] sm:$0xff]
    %v98 = vld [vmem:[#allocation6 + $0x30] sm:$0xff]
    %v99 = vld [vmem:[#allocation6 + $0x38] sm:$0xff]
    %v100 = vld [vmem:[#allocation6 + $0x40] sm:$0xff]
    %v101 = vld [vmem:[#allocation6 + $0x48] sm:$0xff]
    %v102 = vld [vmem:[#allocation6 + $0x50] sm:$0xff]
    %v103 = vld [vmem:[#allocation6 + $0x58] sm:$0xff]
    %v104 = vld [vmem:[#allocation6 + $0x60] sm:$0xff]
    %v105 = vld [vmem:[#allocation6 + $0x68] sm:$0xff]
    %v106 = vld [vmem:[#allocation6 + $0x70] sm:$0xff]
    %v107 = vld [vmem:[#allocation6 + $0x78] sm:$0xff]
    %108 = vmatprep.subr.mxu0 0.0
    %109 = vmatpush1.msra.mxu0 %v92
    %110 = vmatprep.subr.mxu0 0.0
    %111 = vmatpush1.msra.mxu0 %v93
    %112 = vmatprep.subr.mxu0 0.0
    %113 = vmatpush1.msra.mxu0 %v94
    %114 = vmatprep.subr.mxu0 0.0
    %115 = vmatpush1.msra.mxu0 %v95
    %116 = vmatprep.subr.mxu0 0.0
    %117 = vmatpush1.msra.mxu0 %v96
    %118 = vmatprep.subr.mxu0 0.0
    %119 = vmatpush1.msra.mxu0 %v97
    %120 = vmatprep.subr.mxu0 0.0
    %121 = vmatpush1.msra.mxu0 %v98
    %122 = vmatprep.subr.mxu0 0.0
    %123 = vmatpush1.msra.mxu0 %v99
    %124 = vmatprep.subr.mxu0 0.0
    %125 = vmatpush1.msra.mxu0 %v100
    %126 = vmatprep.subr.mxu0 0.0
    %127 = vmatpush1.msra.mxu0 %v101
    %128 = vmatprep.subr.mxu0 0.0
    %129 = vmatpush1.msra.mxu0 %v102
    %130 = vmatprep.subr.mxu0 0.0
    %131 = vmatpush1.msra.mxu0 %v103
    %132 = vmatprep.subr.mxu0 0.0
    %133 = vmatpush1.msra.mxu0 %v104
    %134 = vmatprep.subr.mxu0 0.0
    %135 = vmatpush1.msra.mxu0 %v105
    %136 = vmatprep.subr.mxu0 0.0
    %137 = vmatpush1.msra.mxu0 %v106
    %138 = vmatprep.subr.mxu0 0.0
    %139 = vmatpush1.msra.mxu0 %v107
    %140 = vmatprep.subr.mxu0 0.0
    %141 = vmatpush1.msra.mxu0 0.0
    %142 = vmatprep.subr.mxu0 0.0
    %143 = vmatpush1.msra.mxu0 0.0
    %144 = vmatprep.subr.mxu0 0.0
    %145 = vmatpush1.msra.mxu0 0.0
    %146 = vmatprep.subr.mxu0 0.0
    %147 = vmatpush1.msra.mxu0 0.0
    %148 = vmatprep.subr.mxu0 0.0
    %149 = vmatpush1.msra.mxu0 0.0
    %150 = vmatprep.subr.mxu0 0.0
    %151 = vmatpush1.msra.mxu0 0.0
    %152 = vmatprep.subr.mxu0 0.0
    %153 = vmatpush1.msra.mxu0 0.0
    %154 = vmatprep.subr.mxu0 0.0
    %155 = vmatpush1.msra.mxu0 0.0
    %156 = vmatprep.subr.mxu0 0.0
    %157 = vmatpush1.msra.mxu0 0.0
    %158 = vmatprep.subr.mxu0 0.0
    %159 = vmatpush1.msra.mxu0 0.0
    %160 = vmatprep.subr.mxu0 0.0
    %161 = vmatpush1.msra.mxu0 0.0
    %162 = vmatprep.subr.mxu0 0.0
    %163 = vmatpush1.msra.mxu0 0.0
    %164 = vmatprep.subr.mxu0 0.0
    %165 = vmatpush1.msra.mxu0 0.0
    %166 = vmatprep.subr.mxu0 0.0
    %167 = vmatpush1.msra.mxu0 0.0
    %168 = vmatprep.subr.mxu0 0.0
    %169 = vmatpush1.msra.mxu0 0.0
    %170 = vmatprep.subr.mxu0 0.0
    %171 = vmatpush1.msra.mxu0 0.0
    %172 = vmatprep.mubr.f32.mxu0 0.0
    %173 = vmatmul.mubr.f32.gmra.mrb[0].mxu0 %v76
    %v174 = vpop.f32.mrb[0].mxu0
    %v175 = vadd.f32 0.0, %v174
    %v176 = vpop.f32.mrb[0].mxu0
    %177 = vmatprep.mubr.f32.mxu0 0.0
    %178 = vmatmul.mubr.f32.gmra.mrb[0].mxu0 %v77
    %v179 = vpop.f32.mrb[0].mxu0
    %v180 = vadd.f32 0.0, %v179
    %v181 = vpop.f32.mrb[0].mxu0
    %182 = vmatprep.mubr.f32.mxu0 0.0
    %183 = vmatmul.mubr.f32.gmra.mrb[0].mxu0 %v78
    %v184 = vpop.f32.mrb[0].mxu0
    %v185 = vadd.f32 0.0, %v184
    %v186 = vpop.f32.mrb[0].mxu0
    %187 = vmatprep.mubr.f32.mxu0 0.0
    %188 = vmatmul.mubr.f32.gmra.mrb[0].mxu0 %v79
    %v189 = vpop.f32.mrb[0].mxu0
    %v190 = vadd.f32 0.0, %v189
    %v191 = vpop.f32.mrb[0].mxu0
    %192 = vmatprep.mubr.f32.mxu0 0.0
    %193 = vmatmul.mubr.f32.gmra.mrb[0].mxu0 %v80
    %v194 = vpop.f32.mrb[0].mxu0
    %v195 = vadd.f32 0.0, %v194
    %v196 = vpop.f32.mrb[0].mxu0
    %197 = vmatprep.mubr.f32.mxu0 0.0
    %198 = vmatmul.mubr.f32.gmra.mrb[0].mxu0 %v81
    %v199 = vpop.f32.mrb[0].mxu0
    %v200 = vadd.f32 0.0, %v199
    %v201 = vpop.f32.mrb[0].mxu0
    %202 = vmatprep.mubr.f32.mxu0 0.0
    %203 = vmatmul.mubr.f32.gmra.mrb[0].mxu0 %v82
    %v204 = vpop.f32.mrb[0].mxu0
    %v205 = vadd.f32 0.0, %v204
    %v206 = vpop.f32.mrb[0].mxu0
    %207 = vmatprep.mubr.f32.mxu0 0.0
    %208 = vmatmul.mubr.f32.gmra.mrb[0].mxu0 %v83
    %v209 = vpop.f32.mrb[0].mxu0
    %v210 = vadd.f32 0.0, %v209
    %v211 = vpop.f32.mrb[0].mxu0
    %212 = vmatprep.mubr.f32.mxu0 0.0
    %213 = vmatmul.mubr.f32.gmra.mrb[0].mxu0 %v84
    %v214 = vpop.f32.mrb[0].mxu0
    %v215 = vadd.f32 0.0, %v214
    %v216 = vpop.f32.mrb[0].mxu0
    %217 = vmatprep.mubr.f32.mxu0 0.0
    %218 = vmatmul.mubr.f32.gmra.mrb[0].mxu0 %v85
    %v219 = vpop.f32.mrb[0].mxu0
    %v220 = vadd.f32 0.0, %v219
    %v221 = vpop.f32.mrb[0].mxu0
    %222 = vmatprep.mubr.f32.mxu0 0.0
    %223 = vmatmul.mubr.f32.gmra.mrb[0].mxu0 %v86
    %v224 = vpop.f32.mrb[0].mxu0
    %v225 = vadd.f32 0.0, %v224
    %v226 = vpop.f32.mrb[0].mxu0
    %227 = vmatprep.mubr.f32.mxu0 0.0
    %228 = vmatmul.mubr.f32.gmra.mrb[0].mxu0 %v87
    %v229 = vpop.f32.mrb[0].mxu0
    %v230 = vadd.f32 0.0, %v229
    %v231 = vpop.f32.mrb[0].mxu0
    %232 = vmatprep.mubr.f32.mxu0 0.0
    %233 = vmatmul.mubr.f32.gmra.mrb[0].mxu0 %v88
    %v234 = vpop.f32.mrb[0].mxu0
    %v235 = vadd.f32 0.0, %v234
    %v236 = vpop.f32.mrb[0].mxu0
    %237 = vmatprep.mubr.f32.mxu0 0.0
    %238 = vmatmul.mubr.f32.gmra.mrb[0].mxu0 %v89
    %v239 = vpop.f32.mrb[0].mxu0
    %v240 = vadd.f32 0.0, %v239
    %v241 = vpop.f32.mrb[0].mxu0
    %242 = vmatprep.mubr.f32.mxu0 0.0
    %243 = vmatmul.mubr.f32.gmra.mrb[0].mxu0 %v90
    %v244 = vpop.f32.mrb[0].mxu0
    %v245 = vadd.f32 0.0, %v244
    %v246 = vpop.f32.mrb[0].mxu0
    %247 = vmatprep.mubr.f32.mxu0 0.0
    %248 = vmatmul.mubr.f32.gmra.mrb[0].mxu0 %v91
    %v249 = vpop.f32.mrb[0].mxu0
    %v250 = vadd.f32 0.0, %v249
    %v251 = vpop.f32.mrb[0].mxu0
    %252 = vdwg.mxu0
    %v253 = vadd.f32 %v60, %v175
    %v254 = vadd.f32 %v61, %v180
    %v255 = vadd.f32 %v62, %v185
    %v256 = vadd.f32 %v63, %v190
    %v257 = vadd.f32 %v64, %v195
    %v258 = vadd.f32 %v65, %v200
    %v259 = vadd.f32 %v66, %v205
    %v260 = vadd.f32 %v67, %v210
    %v261 = vadd.f32 %v68, %v215
    %v262 = vadd.f32 %v69, %v220
    %v263 = vadd.f32 %v70, %v225
    %v264 = vadd.f32 %v71, %v230
    %v265 = vadd.f32 %v72, %v235
    %v266 = vadd.f32 %v73, %v240
    %v267 = vadd.f32 %v74, %v245
    %v268 = vadd.f32 %v75, %v250
    %269 = vst [vmem:[#allocation2] sm:$0xff] %v253
    %270 = vst [vmem:[#allocation2 + $0x8] sm:$0xff] %v254
    %271 = vst [vmem:[#allocation2 + $0x10] sm:$0xff] %v255
    %272 = vst [vmem:[#allocation2 + $0x18] sm:$0xff] %v256
    %273 = vst [vmem:[#allocation2 + $0x20] sm:$0xff] %v257
    %274 = vst [vmem:[#allocation2 + $0x28] sm:$0xff] %v258
    %275 = vst [vmem:[#allocation2 + $0x30] sm:$0xff] %v259
    %276 = vst [vmem:[#allocation2 + $0x38] sm:$0xff] %v260
    %277 = vst [vmem:[#allocation2 + $0x40] sm:$0xff] %v261
    %278 = vst [vmem:[#allocation2 + $0x48] sm:$0xff] %v262
    %279 = vst [vmem:[#allocation2 + $0x50] sm:$0xff] %v263
    %280 = vst [vmem:[#allocation2 + $0x58] sm:$0xff] %v264
    %281 = vst [vmem:[#allocation2 + $0x60] sm:$0xff] %v265
    %282 = vst [vmem:[#allocation2 + $0x68] sm:$0xff] %v266
    %283 = vst [vmem:[#allocation2 + $0x70] sm:$0xff] %v267
    %284 = vst [vmem:[#allocation2 + $0x78] sm:$0xff] %v268
    // Predicated region
    $region22: #{tpu_custom_call.1} parent=1 // pred_check
      %p285 = pneg %p40
    $region23: #{tpu_custom_call.1} parent=1 // pred_check_branch
      %287 = sbr.rel (%p285) target = $region25
    $region24: #{tpu_custom_call.1} parent=1 // pred_region
      %v288 = vld [vmem:[#allocation2] sm:$0xff]
      %v289 = vld [vmem:[#allocation2 + $0x8] sm:$0xff]
      %v290 = vld [vmem:[#allocation2 + $0x10] sm:$0xff]
      %v291 = vld [vmem:[#allocation2 + $0x18] sm:$0xff]
      %v292 = vld [vmem:[#allocation2 + $0x20] sm:$0xff]
      %v293 = vld [vmem:[#allocation2 + $0x28] sm:$0xff]
      %v294 = vld [vmem:[#allocation2 + $0x30] sm:$0xff]
      %v295 = vld [vmem:[#allocation2 + $0x38] sm:$0xff]
      %v296 = vld [vmem:[#allocation2 + $0x40] sm:$0xff]
      %v297 = vld [vmem:[#allocation2 + $0x48] sm:$0xff]
      %v298 = vld [vmem:[#allocation2 + $0x50] sm:$0xff]
      %v299 = vld [vmem:[#allocation2 + $0x58] sm:$0xff]
      %v300 = vld [vmem:[#allocation2 + $0x60] sm:$0xff]
      %v301 = vld [vmem:[#allocation2 + $0x68] sm:$0xff]
      %v302 = vld [vmem:[#allocation2 + $0x70] sm:$0xff]
      %v303 = vld [vmem:[#allocation2 + $0x78] sm:$0xff]
      %v304 = vmax.f32 %v288, 0.0
      %v305 = vmax.f32 %v289, 0.0
      %v306 = vmax.f32 %v290, 0.0
      %v307 = vmax.f32 %v291, 0.0
      %v308 = vmax.f32 %v292, 0.0
      %v309 = vmax.f32 %v293, 0.0
      %v310 = vmax.f32 %v294, 0.0
      %v311 = vmax.f32 %v295, 0.0
      %v312 = vmax.f32 %v296, 0.0
      %v313 = vmax.f32 %v297, 0.0
      %v314 = vmax.f32 %v298, 0.0
      %v315 = vmax.f32 %v299, 0.0
      %v316 = vmax.f32 %v300, 0.0
      %v317 = vmax.f32 %v301, 0.0
      %v318 = vmax.f32 %v302, 0.0
      %v319 = vmax.f32 %v303, 0.0
      %320 = vst [vmem:[#allocation8] sm:$0xff] %v304
      %321 = vst [vmem:[#allocation8 + $0x8] sm:$0xff] %v305
      %322 = vst [vmem:[#allocation8 + $0x10] sm:$0xff] %v306
      %323 = vst [vmem:[#allocation8 + $0x18] sm:$0xff] %v307
      %324 = vst [vmem:[#allocation8 + $0x20] sm:$0xff] %v308
      %325 = vst [vmem:[#allocation8 + $0x28] sm:$0xff] %v309
      %326 = vst [vmem:[#allocation8 + $0x30] sm:$0xff] %v310
      %327 = vst [vmem:[#allocation8 + $0x38] sm:$0xff] %v311
      %328 = vst [vmem:[#allocation8 + $0x40] sm:$0xff] %v312
      %329 = vst [vmem:[#allocation8 + $0x48] sm:$0xff] %v313
      %330 = vst [vmem:[#allocation8 + $0x50] sm:$0xff] %v314
      %331 = vst [vmem:[#allocation8 + $0x58] sm:$0xff] %v315
      %332 = vst [vmem:[#allocation8 + $0x60] sm:$0xff] %v316
      %333 = vst [vmem:[#allocation8 + $0x68] sm:$0xff] %v317
      %334 = vst [vmem:[#allocation8 + $0x70] sm:$0xff] %v318
      %335 = vst [vmem:[#allocation8 + $0x78] sm:$0xff] %v319
    $region25: #{tpu_custom_call.1} parent=1 // pred_fallthru
      _
    // Predicated region
    $region26: #{tpu_custom_call.1} parent=1 // pred_check
      _
    $region27: #{tpu_custom_call.1} parent=1 // pred_check_branch
      %337 = sbr.rel (0) target = $region29
    $region28: #{tpu_custom_call.1} parent=1 // pred_region
      %s339 = ssub.s32 2048, 2048
      %340 = vsyncadd [#allocation5], %s339
      %s341 = sshll.u32 [#allocation8], 4
      %s342 = int_to_ptr.vmem [resolvable:$true] %s341
      %347 = dma.vmem_to_hbm [thread:$0]  %s342, 2048, %s2, [#allocation5], 128, 128, 8
    $region29: #{tpu_custom_call.1} parent=1 // pred_fallthru
      _
    // Predicated region
    $region30: #{tpu_custom_call.1} parent=1 // pred_check
      _
    $region31: #{tpu_custom_call.1} parent=1 // pred_check_branch
      %349 = sbr.rel (0) target = $region33
    $region32: #{tpu_custom_call.1} parent=1 // pred_region
      %350 = dma.done [#allocation5], 2048
    $region33: #{tpu_custom_call.1} parent=1 // pred_fallthru
      _
    %351 = vsyncpa [#allocation4], 1
    %352 = vsyncpa [#allocation7], 1
    %353 = vsyncpa [#allocation5], 1

</llo_original>
